<compile_context>
chip_gen: v5e
topology: v5e:2x2
jax: 0.10.0
libtpu: 0.0.40
codegen_flags: <defaults>
</compile_context>

<pallas_src>
import math
import functools
import jax
import jax.numpy as jnp
from jax.experimental import pallas as pl
from jax.experimental.pallas import tpu as pltpu

LANE = 128      # lane width / padded feature dim
SUBLANE = 8     # sublane granularity for the batch axis
NUM_LAYERS = 6  # fc_in + 4 hidden + fc_out


def _round_up(n, m):
    return (n + m - 1) // m * m


# ---------------------------------------------------------------------------
# Kernel: fused 6-layer MLP on one (TB, 128) batch tile.
#   x_ref : (TB, P)        padded activations for this batch tile
#   w_ref : (6, P, P)      all layer weights, zero-padded, [in, out] layout
#   b_ref : (6, 1, P)      all layer biases, zero-padded
#   o_ref : (TB, P)        padded output tile (first y_dim lanes are real)
# ---------------------------------------------------------------------------
def dqn_kernel(x_ref, w_ref, b_ref, o_ref):
    h = x_ref[...]
    # 5 x (linear + ReLU); padded weight cols / bias lanes are zero so the
    # padded lanes stay exactly 0 through every layer.
    for l in range(NUM_LAYERS - 1):
        h = jnp.maximum(
            jnp.dot(h, w_ref[l], preferred_element_type=jnp.float32) + b_ref[l],
            0.0)
    # final linear, no ReLU
    o_ref[...] = (jnp.dot(h, w_ref[NUM_LAYERS - 1],
                          preferred_element_type=jnp.float32)
                  + b_ref[NUM_LAYERS - 1])


# ---------------------------------------------------------------------------
# Parameter packing: build the padded VMEM slabs once.
# ---------------------------------------------------------------------------
def pack_params(params, pad=LANE):
    """params: list of (W[in,out], b[1,out]).  Returns (w_slab, b_slab)."""
    assert len(params) == NUM_LAYERS
    P = pad
    w_slab = jnp.zeros((NUM_LAYERS, P, P), jnp.float32)
    b_slab = jnp.zeros((NUM_LAYERS, 1, P), jnp.float32)
    for l, (w, b) in enumerate(params):
        fi, fo = w.shape
        assert fi <= P and fo <= P, "feature dims must be <= 128 for the slab"
        w_slab = w_slab.at[l, :fi, :fo].set(w.astype(jnp.float32))
        b_slab = b_slab.at[l, 0, :fo].set(jnp.reshape(b, (-1,)).astype(jnp.float32))
    return w_slab, b_slab


# ---------------------------------------------------------------------------
# Wrapper: pad x / batch, run the gridded pallas_call, slice the result.
# ---------------------------------------------------------------------------
@functools.partial(jax.jit, static_argnames=("x_dim", "y_dim", "block_batch"))
def dqn_forward(x, w_slab, b_slab, *, x_dim, y_dim, block_batch=256):
    P = w_slab.shape[-1]
    x2d = jnp.reshape(x, (-1, x_dim)).astype(jnp.float32)
    batch = x2d.shape[0]

    # Batch tile: multiple of 8 sublanes, capped by the (rounded) batch size.
    tb = min(_round_up(block_batch, SUBLANE), _round_up(batch, SUBLANE))
    padded_batch = _round_up(batch, tb)

    # Zero-pad batch (to a tile multiple) and features (to 128 lanes).
    x_pad = jnp.pad(x2d, ((0, padded_batch - batch), (0, P - x_dim)))

    grid = (padded_batch // tb,)
    out = pl.pallas_call(
        dqn_kernel,
        out_shape=jax.ShapeDtypeStruct((padded_batch, P), jnp.float32),
        grid_spec=pltpu.PrefetchScalarGridSpec(
            num_scalar_prefetch=0,
            grid=grid,
            in_specs=[
                # batch tile of activations, pipelined over the grid
                pl.BlockSpec((tb, P), lambda i: (i, 0)),
                # full weight slab, VMEM-resident for every grid step
                pl.BlockSpec((NUM_LAYERS, P, P), lambda i: (0, 0, 0)),
                # full bias slab, VMEM-resident
                pl.BlockSpec((NUM_LAYERS, 1, P), lambda i: (0, 0, 0)),
            ],
            out_specs=pl.BlockSpec((tb, P), lambda i: (i, 0)),
        ),
        compiler_params=pltpu.CompilerParams(
            dimension_semantics=("parallel",),  # shard batch tiles across TCs (v7x)
        ),
    )(x_pad, w_slab, b_slab)

    # Strip batch + lane padding.
    return out[:batch, :y_dim]


# ---------------------------------------------------------------------------
# Init (matches the PyTorch module) + pure-JAX reference
# ---------------------------------------------------------------------------
def xavier_uniform(key, fan_in, fan_out):
    """torch.nn.init.xavier_uniform_ (gain=1); stored [in, out] for x @ W."""
    limit = math.sqrt(6.0 / (fan_in + fan_out))
    return jax.random.uniform(key, (fan_in, fan_out),
                              dtype=jnp.float32, minval=-limit, maxval=limit)


def linear_bias_init(key, fan_in, fan_out):
    """nn.Linear default bias init: U(-1/sqrt(fan_in), 1/sqrt(fan_in))."""
    bound = 1.0 / math.sqrt(fan_in)
    return jax.random.uniform(key, (1, fan_out),
                              dtype=jnp.float32, minval=-bound, maxval=bound)


def make_params(key, x_dim, hidden, y_dim):
    dims = [(x_dim, hidden),      # fc_in
            (hidden, hidden),     # fc_hidden1
            (hidden, hidden),     # fc_hidden2
            (hidden, hidden),     # fc_hidden3
            (hidden, hidden),     # fc_hidden4
            (hidden, y_dim)]      # fc_out
    params = []
    for (fi, fo) in dims:
        key, kw, kb = jax.random.split(key, 3)
        params.append((xavier_uniform(kw, fi, fo), linear_bias_init(kb, fi, fo)))
    return params


def dqn_reference(x, params, x_dim):
    h = jnp.reshape(x, (-1, x_dim)).astype(jnp.float32)
    for i, (w, b) in enumerate(params):
        h = h @ w + b
        if i < len(params) - 1:
            h = jnp.maximum(h, 0.0)
    return h


if __name__ == "__main__":
    # Sizes consistent with the module: x_dim=16, fc_variable_no=32, y_dim=8.
    x_dim, hidden, y_dim = 16, 32, 8
    batch = 2

    key = jax.random.PRNGKey(0)
    key, kx = jax.random.split(key)
    x = jax.random.normal(kx, (batch, x_dim), dtype=jnp.float32)

    params = make_params(key, x_dim, hidden, y_dim)
    w_slab, b_slab = pack_params(params)          # built once, reused per call

    out = dqn_forward(x, w_slab, b_slab, x_dim=x_dim, y_dim=y_dim)
    out = jax.block_until_ready(out)

    ref = dqn_reference(x, params, x_dim)
    assert out.shape == (batch, y_dim), out.shape
    assert jnp.allclose(out, ref, atol=1e-5, rtol=1e-5), (
        "Pallas output mismatch vs reference")

    print("KERNEL_OK")
</pallas_src>

<mosaic_0001>
module attributes {stable_mosaic.version = 11 : i64} {
  func.func @dqn_kernel(%arg0: i32, %arg1: memref<8x128xf32, #tpu.memory_space<vmem>>, %arg2: memref<6x128x128xf32, #tpu.memory_space<vmem>>, %arg3: memref<6x1x128xf32, #tpu.memory_space<vmem>>, %arg4: memref<8x128xf32, #tpu.memory_space<vmem>>) attributes {dimension_semantics = [#tpu.dimension_semantics<parallel>], iteration_bounds = array<i64: 1>, scalar_prefetch = 0 : i64, scratch_operands = 0 : i64, tpu.core_type = #tpu.core_type<tc>, window_params = [{transform_indices = @transform_0, window_bounds = array<i64: 8, 128>}, {pipeline_mode = #tpu.pipeline_mode<synchronous>, transform_indices = @transform_1, window_bounds = array<i64: 6, 128, 128>}, {pipeline_mode = #tpu.pipeline_mode<synchronous>, transform_indices = @transform_2, window_bounds = array<i64: 6, 1, 128>}, {transform_indices = @transform_3, window_bounds = array<i64: 8, 128>}]} {
    %c0 = arith.constant 0 : index
    %c0_0 = arith.constant 0 : index
    %0 = vector.load %arg1[%c0, %c0_0] : memref<8x128xf32, #tpu.memory_space<vmem>>, vector<8x128xf32>
    %c0_1 = arith.constant 0 : index
    %c0_2 = arith.constant 0 : index
    %c0_3 = arith.constant 0 : index
    %1 = vector.load %arg2[%c0_1, %c0_2, %c0_3] : memref<6x128x128xf32, #tpu.memory_space<vmem>>, vector<1x128x128xf32>
    %2 = vector.shape_cast %1 : vector<1x128x128xf32> to vector<128x128xf32>
    %cst = arith.constant dense<0.000000e+00> : vector<8x128xf32>
    %3 = tpu.matmul %0, %2, %cst {dimension_numbers = #tpu.dot_dimension_numbers<[1], [0], [0], [1], [0, 0, 1, 1], [], []>} : vector<8x128xf32>, vector<128x128xf32>, vector<8x128xf32> -> vector<8x128xf32>
    %c0_4 = arith.constant 0 : index
    %c0_5 = arith.constant 0 : index
    %c0_6 = arith.constant 0 : index
    %4 = vector.load %arg3[%c0_4, %c0_5, %c0_6] : memref<6x1x128xf32, #tpu.memory_space<vmem>>, vector<1x1x128xf32>
    %5 = vector.shape_cast %4 : vector<1x1x128xf32> to vector<1x128xf32>
    %6 = vector.broadcast %5 : vector<1x128xf32> to vector<8x128xf32>
    %7 = arith.addf %3, %6 : vector<8x128xf32>
    %cst_7 = arith.constant 0.000000e+00 : f32
    %8 = vector.broadcast %cst_7 : f32 to vector<8x128xf32>
    %9 = arith.maximumf %7, %8 : vector<8x128xf32>
    %c1 = arith.constant 1 : index
    %c0_8 = arith.constant 0 : index
    %c0_9 = arith.constant 0 : index
    %10 = vector.load %arg2[%c1, %c0_8, %c0_9] : memref<6x128x128xf32, #tpu.memory_space<vmem>>, vector<1x128x128xf32>
    %11 = vector.shape_cast %10 : vector<1x128x128xf32> to vector<128x128xf32>
    %cst_10 = arith.constant dense<0.000000e+00> : vector<8x128xf32>
    %12 = tpu.matmul %9, %11, %cst_10 {dimension_numbers = #tpu.dot_dimension_numbers<[1], [0], [0], [1], [0, 0, 1, 1], [], []>} : vector<8x128xf32>, vector<128x128xf32>, vector<8x128xf32> -> vector<8x128xf32>
    %c1_11 = arith.constant 1 : index
    %c0_12 = arith.constant 0 : index
    %c0_13 = arith.constant 0 : index
    %13 = vector.load %arg3[%c1_11, %c0_12, %c0_13] : memref<6x1x128xf32, #tpu.memory_space<vmem>>, vector<1x1x128xf32>
    %14 = vector.shape_cast %13 : vector<1x1x128xf32> to vector<1x128xf32>
    %15 = vector.broadcast %14 : vector<1x128xf32> to vector<8x128xf32>
    %16 = arith.addf %12, %15 : vector<8x128xf32>
    %cst_14 = arith.constant 0.000000e+00 : f32
    %17 = vector.broadcast %cst_14 : f32 to vector<8x128xf32>
    %18 = arith.maximumf %16, %17 : vector<8x128xf32>
    %c2 = arith.constant 2 : index
    %c0_15 = arith.constant 0 : index
    %c0_16 = arith.constant 0 : index
    %19 = vector.load %arg2[%c2, %c0_15, %c0_16] : memref<6x128x128xf32, #tpu.memory_space<vmem>>, vector<1x128x128xf32>
    %20 = vector.shape_cast %19 : vector<1x128x128xf32> to vector<128x128xf32>
    %cst_17 = arith.constant dense<0.000000e+00> : vector<8x128xf32>
    %21 = tpu.matmul %18, %20, %cst_17 {dimension_numbers = #tpu.dot_dimension_numbers<[1], [0], [0], [1], [0, 0, 1, 1], [], []>} : vector<8x128xf32>, vector<128x128xf32>, vector<8x128xf32> -> vector<8x128xf32>
    %c2_18 = arith.constant 2 : index
    %c0_19 = arith.constant 0 : index
    %c0_20 = arith.constant 0 : index
    %22 = vector.load %arg3[%c2_18, %c0_19, %c0_20] : memref<6x1x128xf32, #tpu.memory_space<vmem>>, vector<1x1x128xf32>
    %23 = vector.shape_cast %22 : vector<1x1x128xf32> to vector<1x128xf32>
    %24 = vector.broadcast %23 : vector<1x128xf32> to vector<8x128xf32>
    %25 = arith.addf %21, %24 : vector<8x128xf32>
    %cst_21 = arith.constant 0.000000e+00 : f32
    %26 = vector.broadcast %cst_21 : f32 to vector<8x128xf32>
    %27 = arith.maximumf %25, %26 : vector<8x128xf32>
    %c3 = arith.constant 3 : index
    %c0_22 = arith.constant 0 : index
    %c0_23 = arith.constant 0 : index
    %28 = vector.load %arg2[%c3, %c0_22, %c0_23] : memref<6x128x128xf32, #tpu.memory_space<vmem>>, vector<1x128x128xf32>
    %29 = vector.shape_cast %28 : vector<1x128x128xf32> to vector<128x128xf32>
    %cst_24 = arith.constant dense<0.000000e+00> : vector<8x128xf32>
    %30 = tpu.matmul %27, %29, %cst_24 {dimension_numbers = #tpu.dot_dimension_numbers<[1], [0], [0], [1], [0, 0, 1, 1], [], []>} : vector<8x128xf32>, vector<128x128xf32>, vector<8x128xf32> -> vector<8x128xf32>
    %c3_25 = arith.constant 3 : index
    %c0_26 = arith.constant 0 : index
    %c0_27 = arith.constant 0 : index
    %31 = vector.load %arg3[%c3_25, %c0_26, %c0_27] : memref<6x1x128xf32, #tpu.memory_space<vmem>>, vector<1x1x128xf32>
    %32 = vector.shape_cast %31 : vector<1x1x128xf32> to vector<1x128xf32>
    %33 = vector.broadcast %32 : vector<1x128xf32> to vector<8x128xf32>
    %34 = arith.addf %30, %33 : vector<8x128xf32>
    %cst_28 = arith.constant 0.000000e+00 : f32
    %35 = vector.broadcast %cst_28 : f32 to vector<8x128xf32>
    %36 = arith.maximumf %34, %35 : vector<8x128xf32>
    %c4 = arith.constant 4 : index
    %c0_29 = arith.constant 0 : index
    %c0_30 = arith.constant 0 : index
    %37 = vector.load %arg2[%c4, %c0_29, %c0_30] : memref<6x128x128xf32, #tpu.memory_space<vmem>>, vector<1x128x128xf32>
    %38 = vector.shape_cast %37 : vector<1x128x128xf32> to vector<128x128xf32>
    %cst_31 = arith.constant dense<0.000000e+00> : vector<8x128xf32>
    %39 = tpu.matmul %36, %38, %cst_31 {dimension_numbers = #tpu.dot_dimension_numbers<[1], [0], [0], [1], [0, 0, 1, 1], [], []>} : vector<8x128xf32>, vector<128x128xf32>, vector<8x128xf32> -> vector<8x128xf32>
    %c4_32 = arith.constant 4 : index
    %c0_33 = arith.constant 0 : index
    %c0_34 = arith.constant 0 : index
    %40 = vector.load %arg3[%c4_32, %c0_33, %c0_34] : memref<6x1x128xf32, #tpu.memory_space<vmem>>, vector<1x1x128xf32>
    %41 = vector.shape_cast %40 : vector<1x1x128xf32> to vector<1x128xf32>
    %42 = vector.broadcast %41 : vector<1x128xf32> to vector<8x128xf32>
    %43 = arith.addf %39, %42 : vector<8x128xf32>
    %cst_35 = arith.constant 0.000000e+00 : f32
    %44 = vector.broadcast %cst_35 : f32 to vector<8x128xf32>
    %45 = arith.maximumf %43, %44 : vector<8x128xf32>
    %c5 = arith.constant 5 : index
    %c0_36 = arith.constant 0 : index
    %c0_37 = arith.constant 0 : index
    %46 = vector.load %arg2[%c5, %c0_36, %c0_37] : memref<6x128x128xf32, #tpu.memory_space<vmem>>, vector<1x128x128xf32>
    %47 = vector.shape_cast %46 : vector<1x128x128xf32> to vector<128x128xf32>
    %cst_38 = arith.constant dense<0.000000e+00> : vector<8x128xf32>
    %48 = tpu.matmul %45, %47, %cst_38 {dimension_numbers = #tpu.dot_dimension_numbers<[1], [0], [0], [1], [0, 0, 1, 1], [], []>} : vector<8x128xf32>, vector<128x128xf32>, vector<8x128xf32> -> vector<8x128xf32>
    %c5_39 = arith.constant 5 : index
    %c0_40 = arith.constant 0 : index
    %c0_41 = arith.constant 0 : index
    %49 = vector.load %arg3[%c5_39, %c0_40, %c0_41] : memref<6x1x128xf32, #tpu.memory_space<vmem>>, vector<1x1x128xf32>
    %50 = vector.shape_cast %49 : vector<1x1x128xf32> to vector<1x128xf32>
    %51 = vector.broadcast %50 : vector<1x128xf32> to vector<8x128xf32>
    %52 = arith.addf %48, %51 : vector<8x128xf32>
    %c0_42 = arith.constant 0 : index
    %c0_43 = arith.constant 0 : index
    %53 = vector.load %arg4[%c0_42, %c0_43] : memref<8x128xf32, #tpu.memory_space<vmem>>, vector<8x128xf32>
    tpu.vector_store %arg4[%c0_42, %c0_43], %52 {strides = array<i32>} : memref<8x128xf32, #tpu.memory_space<vmem>>, vector<8x128xf32>,
    return
  }
  func.func @transform_0(%arg0: i32) -> (i32, i32) {
    %c0_i32 = arith.constant 0 : i32
    %c0_i32_0 = arith.constant 0 : i32
    return %arg0, %c0_i32 : i32, i32
  }
  func.func @transform_1(%arg0: i32) -> (i32, i32, i32) {
    %c0_i32 = arith.constant 0 : i32
    %c0_i32_0 = arith.constant 0 : i32
    %c0_i32_1 = arith.constant 0 : i32
    %c0_i32_2 = arith.constant 0 : i32
    return %c0_i32, %c0_i32_0, %c0_i32_1 : i32, i32, i32
  }
  func.func @transform_2(%arg0: i32) -> (i32, i32, i32) {
    %c0_i32 = arith.constant 0 : i32
    %c0_i32_0 = arith.constant 0 : i32
    %c0_i32_1 = arith.constant 0 : i32
    %c0_i32_2 = arith.constant 0 : i32
    return %c0_i32, %c0_i32_0, %c0_i32_1 : i32, i32, i32
  }
  func.func @transform_3(%arg0: i32) -> (i32, i32) {
    %c0_i32 = arith.constant 0 : i32
    %c0_i32_0 = arith.constant 0 : i32
    return %arg0, %c0_i32 : i32, i32
  }
}

</mosaic_0001>

<llo_original>
// kernel: dqn_forward.1
$region0: #{dqn_forward.1}
  #allocation0 [shape = 'u32[]', space=smem, size = 0x4, offset = 0x4, fixed_abs, tag = 'smem constant byte address 0x4 - core index']
  #allocation1 [shape = 'u32[72,128]{1,0:T(1,128)}', space=vmem, size = 0x9000, scoped, tag = 'internal scratch']
  %s0 = inlined_call_operand.vmem [shape: f32[8,128], index: 0, kind: input, shape index: {}]
  %s1 = inlined_call_operand.hbm [shape: f32[6,128,128], index: 1, kind: input, shape index: {}]
  %s2 = inlined_call_operand.vmem [shape: f32[6,1,128], index: 2, kind: input, shape index: {}]
  %s3 = inlined_call_operand.vmem [shape: f32[8,128], index: 3, kind: output, shape index: {}]
  %s4 = sld [smem:[#allocation0]]
  $region26: #{dqn_forward.1} parent=0
    _
  %s6 = ssub.s32 1, %s4
  %s7 = scalar_select 0, %s6, %s4
  $region1: #{dqn_forward.1} parent=0
    #allocation2 [shape = 'u8[393216]{0}', space=vmem, size = 0x60000, scoped, tag = 'input window, operand 1, single buffered']
    #allocation3 [shape = 's32[1]{0}', space=sflag, size = 0x4, scoped, tag = 'scoped memory for dqn_forward.1']
    %8 = vsyncpa [#allocation3], 0
    // Predicated region
    $region2: #{dqn_forward.1} parent=1 // pred_check
      _
    $region3: #{dqn_forward.1} parent=1 // pred_check_branch
      %10 = sbr.rel (0) target = $region5
    $region4: #{dqn_forward.1} parent=1 // pred_region
      _
    $region5: #{dqn_forward.1} parent=1 // pred_fallthru
      _
    // Predicated region
    $region6: #{dqn_forward.1} parent=1 // pred_check
      _
    $region7: #{dqn_forward.1} parent=1 // pred_check_branch
      %12 = sbr.rel (0) target = $region9
    $region8: #{dqn_forward.1} parent=1 // pred_region
      %14 = vsyncadd [#allocation3], 0
      %s15 = sshll.u32 %s1, 4
      %s16 = int_to_ptr.hbm [resolvable:$true] %s15
      %s17 = sshll.u32 [#allocation2], 4
      %s18 = int_to_ptr.vmem [resolvable:$true] %s17
      %23 = dma.hbm_to_vmem [thread:$0]  %s16, 12288, %s18, [#allocation3], 128, 128, 8
    $region9: #{dqn_forward.1} parent=1 // pred_fallthru
      _
    // Predicated region
    $region10: #{dqn_forward.1} parent=1 // pred_check
      _
    $region11: #{dqn_forward.1} parent=1 // pred_check_branch
      %25 = sbr.rel (0) target = $region13
    $region12: #{dqn_forward.1} parent=1 // pred_region
      _
    $region13: #{dqn_forward.1} parent=1 // pred_fallthru
      _
    // Predicated region
    $region14: #{dqn_forward.1} parent=1 // pred_check
      _
    $region15: #{dqn_forward.1} parent=1 // pred_check_branch
      %27 = sbr.rel (0) target = $region17
    $region16: #{dqn_forward.1} parent=1 // pred_region
      %29 = dma.done [#allocation3], 12288
    $region17: #{dqn_forward.1} parent=1 // pred_fallthru
      _
    %v30 = vld [vmem:[%s0] sm:$0xff]
    %v31 = vld [vmem:[#allocation2] sm:$0xff]
    %v32 = vld [vmem:[#allocation2 + $0x8] sm:$0xff]
    %v33 = vld [vmem:[#allocation2 + $0x10] sm:$0xff]
    %v34 = vld [vmem:[#allocation2 + $0x18] sm:$0xff]
    %v35 = vld [vmem:[#allocation2 + $0x20] sm:$0xff]
    %v36 = vld [vmem:[#allocation2 + $0x28] sm:$0xff]
    %v37 = vld [vmem:[#allocation2 + $0x30] sm:$0xff]
    %v38 = vld [vmem:[#allocation2 + $0x38] sm:$0xff]
    %v39 = vld [vmem:[#allocation2 + $0x40] sm:$0xff]
    %v40 = vld [vmem:[#allocation2 + $0x48] sm:$0xff]
    %v41 = vld [vmem:[#allocation2 + $0x50] sm:$0xff]
    %v42 = vld [vmem:[#allocation2 + $0x58] sm:$0xff]
    %v43 = vld [vmem:[#allocation2 + $0x60] sm:$0xff]
    %v44 = vld [vmem:[#allocation2 + $0x68] sm:$0xff]
    %v45 = vld [vmem:[#allocation2 + $0x70] sm:$0xff]
    %v46 = vld [vmem:[#allocation2 + $0x78] sm:$0xff]
    %v47 = vld [vmem:[%s2] sm:$0x1]
    %v49 = vperm.slane %v47, 0
    %51 = vmatpush.msra.mxu0 %v46
    %52 = vmatpush.msra.mxu0 %v45
    %53 = vmatpush.msra.mxu0 %v44
    %54 = vmatpush.msra.mxu0 %v43
    %55 = vmatpush.msra.mxu0 %v42
    %56 = vmatpush.msra.mxu0 %v41
    %57 = vmatpush.msra.mxu0 %v40
    %58 = vmatpush.msra.mxu0 %v39
    %59 = vmatpush.msra.mxu0 %v38
    %60 = vmatpush.msra.mxu0 %v37
    %61 = vmatpush.msra.mxu0 %v36
    %62 = vmatpush.msra.mxu0 %v35
    %63 = vmatpush.msra.mxu0 %v34
    %64 = vmatpush.msra.mxu0 %v33
    %65 = vmatpush.msra.mxu0 %v32
    %66 = vmatpush.msra.mxu0 %v31
    %67 = vmatmul.f32.gmra.mxu0 %v30
    %v68 = vpop.f32.mrf.mxu0
    %v69 = vadd.f32 %v49, %v68
    %70 = vdwg.mxu0
    %v71 = vmax.f32 %v69, 0.0
    %s72 = scalar_lea.vmem [#allocation2], 128
    %v73 = vld [vmem:[%s72] sm:$0xff]
    %v74 = vld [vmem:[%s72 + $0x8] sm:$0xff]
    %v75 = vld [vmem:[%s72 + $0x10] sm:$0xff]
    %v76 = vld [vmem:[%s72 + $0x18] sm:$0xff]
    %v77 = vld [vmem:[%s72 + $0x20] sm:$0xff]
    %v78 = vld [vmem:[%s72 + $0x28] sm:$0xff]
    %v79 = vld [vmem:[%s72 + $0x30] sm:$0xff]
    %v80 = vld [vmem:[%s72 + $0x38] sm:$0xff]
    %v81 = vld [vmem:[%s72 + $0x40] sm:$0xff]
    %v82 = vld [vmem:[%s72 + $0x48] sm:$0xff]
    %v83 = vld [vmem:[%s72 + $0x50] sm:$0xff]
    %v84 = vld [vmem:[%s72 + $0x58] sm:$0xff]
    %v85 = vld [vmem:[%s72 + $0x60] sm:$0xff]
    %v86 = vld [vmem:[%s72 + $0x68] sm:$0xff]
    %v87 = vld [vmem:[%s72 + $0x70] sm:$0xff]
    %v88 = vld [vmem:[%s72 + $0x78] sm:$0xff]
    %s89 = scalar_lea.vmem %s2, 1
    %v90 = vld [vmem:[%s89] sm:$0x1]
    %v92 = vperm.slane %v90, 0
    %94 = vmatpush.msra.mxu0 %v88
    %95 = vmatpush.msra.mxu0 %v87
    %96 = vmatpush.msra.mxu0 %v86
    %97 = vmatpush.msra.mxu0 %v85
    %98 = vmatpush.msra.mxu0 %v84
    %99 = vmatpush.msra.mxu0 %v83
    %100 = vmatpush.msra.mxu0 %v82
    %101 = vmatpush.msra.mxu0 %v81
    %102 = vmatpush.msra.mxu0 %v80
    %103 = vmatpush.msra.mxu0 %v79
    %104 = vmatpush.msra.mxu0 %v78
    %105 = vmatpush.msra.mxu0 %v77
    %106 = vmatpush.msra.mxu0 %v76
    %107 = vmatpush.msra.mxu0 %v75
    %108 = vmatpush.msra.mxu0 %v74
    %109 = vmatpush.msra.mxu0 %v73
    %110 = vmatmul.f32.gmra.mxu0 %v71
    %v111 = vpop.f32.mrf.mxu0
    %v112 = vadd.f32 %v92, %v111
    %113 = vdwg.mxu0
    %v114 = vmax.f32 %v112, 0.0
    %s115 = scalar_lea.vmem [#allocation2], 256
    %v116 = vld [vmem:[%s115] sm:$0xff]
    %v117 = vld [vmem:[%s115 + $0x8] sm:$0xff]
    %v118 = vld [vmem:[%s115 + $0x10] sm:$0xff]
    %v119 = vld [vmem:[%s115 + $0x18] sm:$0xff]
    %v120 = vld [vmem:[%s115 + $0x20] sm:$0xff]
    %v121 = vld [vmem:[%s115 + $0x28] sm:$0xff]
    %v122 = vld [vmem:[%s115 + $0x30] sm:$0xff]
    %v123 = vld [vmem:[%s115 + $0x38] sm:$0xff]
    %v124 = vld [vmem:[%s115 + $0x40] sm:$0xff]
    %v125 = vld [vmem:[%s115 + $0x48] sm:$0xff]
    %v126 = vld [vmem:[%s115 + $0x50] sm:$0xff]
    %v127 = vld [vmem:[%s115 + $0x58] sm:$0xff]
    %v128 = vld [vmem:[%s115 + $0x60] sm:$0xff]
    %v129 = vld [vmem:[%s115 + $0x68] sm:$0xff]
    %v130 = vld [vmem:[%s115 + $0x70] sm:$0xff]
    %v131 = vld [vmem:[%s115 + $0x78] sm:$0xff]
    %s132 = scalar_lea.vmem %s2, 2
    %v133 = vld [vmem:[%s132] sm:$0x1]
    %v135 = vperm.slane %v133, 0
    %137 = vmatpush.msra.mxu0 %v131
    %138 = vmatpush.msra.mxu0 %v130
    %139 = vmatpush.msra.mxu0 %v129
    %140 = vmatpush.msra.mxu0 %v128
    %141 = vmatpush.msra.mxu0 %v127
    %142 = vmatpush.msra.mxu0 %v126
    %143 = vmatpush.msra.mxu0 %v125
    %144 = vmatpush.msra.mxu0 %v124
    %145 = vmatpush.msra.mxu0 %v123
    %146 = vmatpush.msra.mxu0 %v122
    %147 = vmatpush.msra.mxu0 %v121
    %148 = vmatpush.msra.mxu0 %v120
    %149 = vmatpush.msra.mxu0 %v119
    %150 = vmatpush.msra.mxu0 %v118
    %151 = vmatpush.msra.mxu0 %v117
    %152 = vmatpush.msra.mxu0 %v116
    %153 = vmatmul.f32.gmra.mxu0 %v114
    %v154 = vpop.f32.mrf.mxu0
    %v155 = vadd.f32 %v135, %v154
    %156 = vdwg.mxu0
    %v157 = vmax.f32 %v155, 0.0
    %s158 = scalar_lea.vmem [#allocation2], 384
    %v159 = vld [vmem:[%s158] sm:$0xff]
    %v160 = vld [vmem:[%s158 + $0x8] sm:$0xff]
    %v161 = vld [vmem:[%s158 + $0x10] sm:$0xff]
    %v162 = vld [vmem:[%s158 + $0x18] sm:$0xff]
    %v163 = vld [vmem:[%s158 + $0x20] sm:$0xff]
    %v164 = vld [vmem:[%s158 + $0x28] sm:$0xff]
    %v165 = vld [vmem:[%s158 + $0x30] sm:$0xff]
    %v166 = vld [vmem:[%s158 + $0x38] sm:$0xff]
    %v167 = vld [vmem:[%s158 + $0x40] sm:$0xff]
    %v168 = vld [vmem:[%s158 + $0x48] sm:$0xff]
    %v169 = vld [vmem:[%s158 + $0x50] sm:$0xff]
    %v170 = vld [vmem:[%s158 + $0x58] sm:$0xff]
    %v171 = vld [vmem:[%s158 + $0x60] sm:$0xff]
    %v172 = vld [vmem:[%s158 + $0x68] sm:$0xff]
    %v173 = vld [vmem:[%s158 + $0x70] sm:$0xff]
    %v174 = vld [vmem:[%s158 + $0x78] sm:$0xff]
    %s175 = scalar_lea.vmem %s2, 3
    %v176 = vld [vmem:[%s175] sm:$0x1]
    %v178 = vperm.slane %v176, 0
    %180 = vmatpush.msra.mxu0 %v174
    %181 = vmatpush.msra.mxu0 %v173
    %182 = vmatpush.msra.mxu0 %v172
    %183 = vmatpush.msra.mxu0 %v171
    %184 = vmatpush.msra.mxu0 %v170
    %185 = vmatpush.msra.mxu0 %v169
    %186 = vmatpush.msra.mxu0 %v168
    %187 = vmatpush.msra.mxu0 %v167
    %188 = vmatpush.msra.mxu0 %v166
    %189 = vmatpush.msra.mxu0 %v165
    %190 = vmatpush.msra.mxu0 %v164
    %191 = vmatpush.msra.mxu0 %v163
    %192 = vmatpush.msra.mxu0 %v162
    %193 = vmatpush.msra.mxu0 %v161
    %194 = vmatpush.msra.mxu0 %v160
    %195 = vmatpush.msra.mxu0 %v159
    %196 = vmatmul.f32.gmra.mxu0 %v157
    %v197 = vpop.f32.mrf.mxu0
    %v198 = vadd.f32 %v178, %v197
    %199 = vdwg.mxu0
    %v200 = vmax.f32 %v198, 0.0
    %s201 = scalar_lea.vmem [#allocation2], 512
    %v202 = vld [vmem:[%s201] sm:$0xff]
    %v203 = vld [vmem:[%s201 + $0x8] sm:$0xff]
    %v204 = vld [vmem:[%s201 + $0x10] sm:$0xff]
    %v205 = vld [vmem:[%s201 + $0x18] sm:$0xff]
    %v206 = vld [vmem:[%s201 + $0x20] sm:$0xff]
    %v207 = vld [vmem:[%s201 + $0x28] sm:$0xff]
    %v208 = vld [vmem:[%s201 + $0x30] sm:$0xff]
    %v209 = vld [vmem:[%s201 + $0x38] sm:$0xff]
    %v210 = vld [vmem:[%s201 + $0x40] sm:$0xff]
    %v211 = vld [vmem:[%s201 + $0x48] sm:$0xff]
    %v212 = vld [vmem:[%s201 + $0x50] sm:$0xff]
    %v213 = vld [vmem:[%s201 + $0x58] sm:$0xff]
    %v214 = vld [vmem:[%s201 + $0x60] sm:$0xff]
    %v215 = vld [vmem:[%s201 + $0x68] sm:$0xff]
    %v216 = vld [vmem:[%s201 + $0x70] sm:$0xff]
    %v217 = vld [vmem:[%s201 + $0x78] sm:$0xff]
    %s218 = scalar_lea.vmem %s2, 4
    %v219 = vld [vmem:[%s218] sm:$0x1]
    %v221 = vperm.slane %v219, 0
    %223 = vmatpush.msra.mxu0 %v217
    %224 = vmatpush.msra.mxu0 %v216
    %225 = vmatpush.msra.mxu0 %v215
    %226 = vmatpush.msra.mxu0 %v214
    %227 = vmatpush.msra.mxu0 %v213
    %228 = vmatpush.msra.mxu0 %v212
    %229 = vmatpush.msra.mxu0 %v211
    %230 = vmatpush.msra.mxu0 %v210
    %231 = vmatpush.msra.mxu0 %v209
    %232 = vmatpush.msra.mxu0 %v208
    %233 = vmatpush.msra.mxu0 %v207
    %234 = vmatpush.msra.mxu0 %v206
    %235 = vmatpush.msra.mxu0 %v205
    %236 = vmatpush.msra.mxu0 %v204
    %237 = vmatpush.msra.mxu0 %v203
    %238 = vmatpush.msra.mxu0 %v202
    %239 = vmatmul.f32.gmra.mxu0 %v200
    %v240 = vpop.f32.mrf.mxu0
    %v241 = vadd.f32 %v221, %v240
    %242 = vdwg.mxu0
    %v243 = vmax.f32 %v241, 0.0
    %s244 = scalar_lea.vmem [#allocation2], 640
    %v245 = vld [vmem:[%s244] sm:$0xff]
    %v246 = vld [vmem:[%s244 + $0x8] sm:$0xff]
    %v247 = vld [vmem:[%s244 + $0x10] sm:$0xff]
    %v248 = vld [vmem:[%s244 + $0x18] sm:$0xff]
    %v249 = vld [vmem:[%s244 + $0x20] sm:$0xff]
    %v250 = vld [vmem:[%s244 + $0x28] sm:$0xff]
    %v251 = vld [vmem:[%s244 + $0x30] sm:$0xff]
    %v252 = vld [vmem:[%s244 + $0x38] sm:$0xff]
    %v253 = vld [vmem:[%s244 + $0x40] sm:$0xff]
    %v254 = vld [vmem:[%s244 + $0x48] sm:$0xff]
    %v255 = vld [vmem:[%s244 + $0x50] sm:$0xff]
    %v256 = vld [vmem:[%s244 + $0x58] sm:$0xff]
    %v257 = vld [vmem:[%s244 + $0x60] sm:$0xff]
    %v258 = vld [vmem:[%s244 + $0x68] sm:$0xff]
    %v259 = vld [vmem:[%s244 + $0x70] sm:$0xff]
    %v260 = vld [vmem:[%s244 + $0x78] sm:$0xff]
    %s261 = scalar_lea.vmem %s2, 5
    %v262 = vld [vmem:[%s261] sm:$0x1]
    %v264 = vperm.slane %v262, 0
    %266 = vmatpush.msra.mxu0 %v260
    %267 = vmatpush.msra.mxu0 %v259
    %268 = vmatpush.msra.mxu0 %v258
    %269 = vmatpush.msra.mxu0 %v257
    %270 = vmatpush.msra.mxu0 %v256
    %271 = vmatpush.msra.mxu0 %v255
    %272 = vmatpush.msra.mxu0 %v254
    %273 = vmatpush.msra.mxu0 %v253
    %274 = vmatpush.msra.mxu0 %v252
    %275 = vmatpush.msra.mxu0 %v251
    %276 = vmatpush.msra.mxu0 %v250
    %277 = vmatpush.msra.mxu0 %v249
    %278 = vmatpush.msra.mxu0 %v248
    %279 = vmatpush.msra.mxu0 %v247
    %280 = vmatpush.msra.mxu0 %v246
    %281 = vmatpush.msra.mxu0 %v245
    %282 = vmatmul.f32.gmra.mxu0 %v243
    %v283 = vpop.f32.mrf.mxu0
    %v284 = vadd.f32 %v264, %v283
    %285 = vdwg.mxu0
    %286 = vst [vmem:[%s3] sm:$0xff] %v284
    // Predicated region
    $region18: #{dqn_forward.1} parent=1 // pred_check
      _
    $region19: #{dqn_forward.1} parent=1 // pred_check_branch
      %288 = sbr.rel (0) target = $region21
    $region20: #{dqn_forward.1} parent=1 // pred_region
      _
    $region21: #{dqn_forward.1} parent=1 // pred_fallthru
      _
    // Predicated region
    $region22: #{dqn_forward.1} parent=1 // pred_check
      _
    $region23: #{dqn_forward.1} parent=1 // pred_check_branch
      %290 = sbr.rel (0) target = $region25
    $region24: #{dqn_forward.1} parent=1 // pred_region
      _
    $region25: #{dqn_forward.1} parent=1 // pred_fallthru
      _
    %291 = vsyncpa [#allocation3], 1

</llo_original>
